<compile_context>
chip_gen: v5e
topology: v5e:2x2
jax: 0.10.0
libtpu: 0.0.40
codegen_flags: <defaults>
</compile_context>

<pallas_src>
import math

import jax
import jax.numpy as jnp
from jax.experimental import pallas as pl
from jax.experimental.pallas import tpu as pltpu

# Below this many total bytes, the Pallas launch overhead dominates the copy;
# fall back to a plain XLA copy.
_MIN_KERNEL_BYTES = 1 << 20  # 1 MiB


def _chunk_bounds(n, n_chunks):
    """Split range(n) into up to n_chunks contiguous (start, size) pieces."""
    n_chunks = max(1, min(int(n_chunks), int(n)))
    base, rem = divmod(int(n), n_chunks)
    bounds, start = [], 0
    for c in range(n_chunks):
        size = base + (1 if c < rem else 0)
        bounds.append((start, size))
        start += size
    return bounds


def _make_hbm_copy_kernel(shapes_dtypes, n_chunks):
    """Build a kernel that copies each input to its output via HBM->HBM DMA."""
    n = len(shapes_dtypes)

    nbytes = [
        math.prod(shape) * jnp.dtype(dtype).itemsize if len(shape) > 0
        else jnp.dtype(dtype).itemsize
        for (shape, dtype) in shapes_dtypes
    ]
    # Issue the largest tensor's DMAs first (maximum in-flight time).
    order = sorted(range(n), key=lambda t: -nbytes[t])

    # Static (trace-time) chunking along the leading dim.
    per_tensor_chunks = []
    for (shape, dtype) in shapes_dtypes:
        if len(shape) == 0:
            per_tensor_chunks.append(None)  # scalar: copy whole ref
        else:
            chunks = _chunk_bounds(shape[0], n_chunks)
            per_tensor_chunks.append(None if len(chunks) == 1 else chunks)
    total_dmas = sum(1 if c is None else len(c) for c in per_tensor_chunks)

    def kernel(*refs):
        in_refs = refs[:n]
        out_refs = refs[n:2 * n]
        sem = refs[2 * n]

        copies = []
        dma_idx = 0
        for t in order:
            chunks = per_tensor_chunks[t]
            if chunks is None:
                cp = pltpu.make_async_copy(in_refs[t], out_refs[t],
                                           sem.at[dma_idx])
                cp.start()
                copies.append(cp)
                dma_idx += 1
            else:
                for (start, size) in chunks:
                    src = in_refs[t].at[pl.ds(start, size)]
                    dst = out_refs[t].at[pl.ds(start, size)]
                    cp = pltpu.make_async_copy(src, dst, sem.at[dma_idx])
                    cp.start()
                    copies.append(cp)
                    dma_idx += 1
        for cp in copies:
            cp.wait()

    return kernel, total_dmas


def _pallas_materialized_copy(tensors, n_chunks=1):
    """Fresh HBM buffers holding copies of `tensors` via one Pallas call."""
    shapes_dtypes = [(tuple(t.shape), t.dtype) for t in tensors]
    kernel, total_dmas = _make_hbm_copy_kernel(shapes_dtypes, n_chunks)
    total_bytes = sum(int(t.size) * t.dtype.itemsize for t in tensors)
    n = len(tensors)
    return pl.pallas_call(
        kernel,
        out_shape=tuple(jax.ShapeDtypeStruct(t.shape, t.dtype) for t in tensors),
        # Raw HBM refs; the DMA engine does all data movement.  Intentionally
        # NOT a VMEM-staged BlockSpec pipeline (see header comment).
        in_specs=[pl.BlockSpec(memory_space=pl.ANY)] * n,
        out_specs=tuple(pl.BlockSpec(memory_space=pl.ANY) for _ in tensors),
        scratch_shapes=[pltpu.SemaphoreType.DMA((total_dmas,))],
        # Advisory for XLA's scheduler: pure memory traffic (read + write each
        # byte), no compute -> allow overlap with neighboring ops.
        cost_estimate=pl.CostEstimate(
            flops=0, transcendentals=0, bytes_accessed=2 * total_bytes),
    )(*tensors)


def dummy_multi_input_forward(x1, x2, x3, materialize=False, *,
                              min_kernel_bytes=_MIN_KERNEL_BYTES, n_chunks=1):
    """Reproduces DummyMultiInputModel.forward: returns (x1, x2, x3).

    Default (materialize=False): zero-cost identity -- inputs returned
    directly, no kernel, no HBM traffic.  NOTE: the same-buffer property only
    holds outside jax.jit; under jit, XLA may insert copies at the call
    boundary unless donation/aliasing (e.g. donate_argnums) is configured --
    which is also the preferred zero-traffic option when fresh buffers are
    not actually required.

    materialize=True: returns freshly materialized copies of x1/x2.
      * total bytes < min_kernel_bytes: plain XLA copy (launch overhead of a
        Pallas call would dominate for sub-VMEM-sized tensors).
      * otherwise: Pallas HBM->HBM DMA kernel.  n_chunks > 1 issues multiple
        outstanding DMA descriptors per tensor (v7x bandwidth tuning knob).

    x3 is a Python List[float] (matching the torch signature) and is passed
    through untouched in all paths.
    """
    if not materialize:
        # TODO(synk): x3 is List[float] in the torch signature; it is not a
        # tensor, so it is returned as-is and does not participate in tracing.
        return x1, x2, x3

    total_bytes = (int(x1.size) * x1.dtype.itemsize
                   + int(x2.size) * x2.dtype.itemsize)
    if total_bytes < min_kernel_bytes:
        # Tiny tensors: XLA-native copy fuses with surrounding ops and avoids
        # the Mosaic custom-call launch + semaphore overhead entirely.
        return jnp.copy(x1), jnp.copy(x2), x3

    o1, o2 = _pallas_materialized_copy((x1, x2), n_chunks=n_chunks)
    return o1, o2, x3


if __name__ == "__main__":
    key = jax.random.PRNGKey(0)
    k1, k2 = jax.random.split(key)

    # Small shapes consistent with "various inputs of channels-last format":
    #   x1: NCHW image-like tensor, x2: (batch, seq, hidden) tensor,
    #   x3: a plain list of floats.
    x1 = jax.random.normal(k1, (2, 4, 16, 16), dtype=jnp.float32)
    x2 = jax.random.normal(k2, (2, 8, 32), dtype=jnp.float32)
    x3 = [1.0, 2.0, 3.0]

    # 1) Fast (default) path: kernel elided entirely, inputs returned directly.
    f1, f2, f3 = dummy_multi_input_forward(x1, x2, x3)
    assert f1 is x1 and f2 is x2 and f3 is x3

    # 2) materialize=True with default size guard: these tensors are tiny
    #    (~10 KiB total), so this takes the XLA-copy path, not the kernel.
    s1, s2, s3 = dummy_multi_input_forward(x1, x2, x3, materialize=True)
    jax.block_until_ready((s1, s2))
    assert jnp.array_equal(s1, x1) and jnp.array_equal(s2, x2) and s3 == x3

    # 3) Force the Pallas HBM->HBM DMA kernel path (single DMA per tensor).
    o1, o2, o3 = dummy_multi_input_forward(
        x1, x2, x3, materialize=True, min_kernel_bytes=0, n_chunks=1)
    jax.block_until_ready((o1, o2))
    assert o1.shape == x1.shape and o1.dtype == x1.dtype
    assert o2.shape == x2.shape and o2.dtype == x2.dtype
    assert jnp.array_equal(o1, x1) and jnp.array_equal(o2, x2) and o3 == x3

    # 4) Chunked-DMA variant (v7x bandwidth knob): 2 outstanding DMAs/tensor.
    c1, c2, c3 = dummy_multi_input_forward(
        x1, x2, x3, materialize=True, min_kernel_bytes=0, n_chunks=2)
    jax.block_until_ready((c1, c2))
    assert jnp.array_equal(c1, x1) and jnp.array_equal(c2, x2) and c3 == x3

    print("KERNEL_OK")
</pallas_src>

<mosaic_0001>
module attributes {stable_mosaic.version = 11 : i64} {
  func.func @kernel(%arg0: memref<2x4x16x16xf32, #tpu.memory_space<any>>, %arg1: memref<2x8x32xf32, #tpu.memory_space<any>>, %arg2: memref<2x4x16x16xf32, #tpu.memory_space<any>>, %arg3: memref<2x8x32xf32, #tpu.memory_space<any>>, %arg4: memref<2x!tpu.dma_semaphore, #tpu.memory_space<semaphore_mem>>) attributes {dimension_semantics = [], scalar_prefetch = 0 : i64, scratch_operands = 1 : i64, tpu.core_type = #tpu.core_type<tc>} {
    %c0_i32 = arith.constant 0 : i32
    %0 = tpu.memref_slice %arg4[%c0_i32] : memref<2x!tpu.dma_semaphore, #tpu.memory_space<semaphore_mem>> -> memref<1x!tpu.dma_semaphore, #tpu.memory_space<semaphore_mem>>
    %1 = tpu.memref_squeeze %0 : memref<1x!tpu.dma_semaphore, #tpu.memory_space<semaphore_mem>> -> memref<!tpu.dma_semaphore, #tpu.memory_space<semaphore_mem>>
    tpu.enqueue_dma source(%arg0 : memref<2x4x16x16xf32, #tpu.memory_space<any>>) target(%arg2 : memref<2x4x16x16xf32, #tpu.memory_space<any>>) target_semaphore(%1 : memref<!tpu.dma_semaphore, #tpu.memory_space<semaphore_mem>>)
    %c1_i32 = arith.constant 1 : i32
    %2 = tpu.memref_slice %arg4[%c1_i32] : memref<2x!tpu.dma_semaphore, #tpu.memory_space<semaphore_mem>> -> memref<1x!tpu.dma_semaphore, #tpu.memory_space<semaphore_mem>>
    %3 = tpu.memref_squeeze %2 : memref<1x!tpu.dma_semaphore, #tpu.memory_space<semaphore_mem>> -> memref<!tpu.dma_semaphore, #tpu.memory_space<semaphore_mem>>
    tpu.enqueue_dma source(%arg1 : memref<2x8x32xf32, #tpu.memory_space<any>>) target(%arg3 : memref<2x8x32xf32, #tpu.memory_space<any>>) target_semaphore(%3 : memref<!tpu.dma_semaphore, #tpu.memory_space<semaphore_mem>>)
    %c0_i32_0 = arith.constant 0 : i32
    %4 = tpu.memref_slice %arg4[%c0_i32_0] : memref<2x!tpu.dma_semaphore, #tpu.memory_space<semaphore_mem>> -> memref<1x!tpu.dma_semaphore, #tpu.memory_space<semaphore_mem>>
    %5 = tpu.memref_squeeze %4 : memref<1x!tpu.dma_semaphore, #tpu.memory_space<semaphore_mem>> -> memref<!tpu.dma_semaphore, #tpu.memory_space<semaphore_mem>>
    tpu.wait_dma2 semaphore(%5 : memref<!tpu.dma_semaphore, #tpu.memory_space<semaphore_mem>>) src(%arg0 : memref<2x4x16x16xf32, #tpu.memory_space<any>>) dst(%arg2 : memref<2x4x16x16xf32, #tpu.memory_space<any>>)
    %c1_i32_1 = arith.constant 1 : i32
    %6 = tpu.memref_slice %arg4[%c1_i32_1] : memref<2x!tpu.dma_semaphore, #tpu.memory_space<semaphore_mem>> -> memref<1x!tpu.dma_semaphore, #tpu.memory_space<semaphore_mem>>
    %7 = tpu.memref_squeeze %6 : memref<1x!tpu.dma_semaphore, #tpu.memory_space<semaphore_mem>> -> memref<!tpu.dma_semaphore, #tpu.memory_space<semaphore_mem>>
    tpu.wait_dma2 semaphore(%7 : memref<!tpu.dma_semaphore, #tpu.memory_space<semaphore_mem>>) src(%arg1 : memref<2x8x32xf32, #tpu.memory_space<any>>) dst(%arg3 : memref<2x8x32xf32, #tpu.memory_space<any>>)
    return
  }
}

</mosaic_0001>

<llo_original>
// kernel: tpu_custom_call.1
$region0: #{tpu_custom_call.1}
  #allocation0 [shape = 'u32[]', space=smem, size = 0x4, offset = 0x4, fixed_abs, tag = 'smem constant byte address 0x4 - core index']
  #allocation1 [shape = 'u32[72,128]{1,0:T(1,128)}', space=vmem, size = 0x9000, scoped, tag = 'internal scratch']
  #allocation2 [shape = 's32[2]{0}', space=sflag, size = 0x8, scoped, tag = 'scratch operand']
  #allocation3 [shape = 's32[]', space=sflag, size = 0x4, offset = 0, fixed_abs, tag = 'sflag constant byte address 0x0 - dummy sync flag']
  #allocation4 [shape = 'u32[0]{0}', space=smem, size = 0, offset = 0, fixed_abs, tag = 'smem constant byte address 0x0 - null']
  #allocation5 [shape = 's32[]', space=sflag, size = 0x4, offset = 0, fixed_abs, tag = 'sflag constant byte address 0x0 - dummy sync flag']
  #allocation6 [shape = 'u32[0]{0}', space=smem, size = 0, offset = 0, fixed_abs, tag = 'smem constant byte address 0x0 - null']
  %s0 = inlined_call_operand.hbm [shape: f32[2,4,16,16], index: 0, kind: input, shape index: {}]
  %s1 = inlined_call_operand.hbm [shape: f32[2,8,32], index: 1, kind: input, shape index: {}]
  %s2 = inlined_call_operand.hbm [shape: f32[2,4,16,16], index: 2, kind: output, shape index: {0}]
  %s3 = inlined_call_operand.hbm [shape: f32[2,8,32], index: 3, kind: output, shape index: {1}]
  %4 = xla_tuple %s2, %s3
  %s5 = sld [smem:[#allocation0]]
  $region2: #{tpu_custom_call.1} parent=0
    _
  %s7 = ssub.s32 1, %s5
  %s8 = scalar_select 0, %s7, %s5
  %s10 = sshll.u32 1, 14
  %s11 = sxor.u32 4294967295, %s10
  %s13 = sshll.u32 %s0, 4
  %s14 = int_to_ptr.hbm [resolvable:$true] %s13
  %s15 = sshll.u32 %s2, 4
  %s16 = int_to_ptr.hbm [resolvable:$true] %s15
  %19 = dma.general %s14, 2048, %s16, [#allocation2], [#allocation3], [#allocation4], 0, 0
  %s20 = scalar_lea.sflag [#allocation2], 1
  %s22 = sshll.u32 1, 14
  %s23 = sxor.u32 4294967295, %s22
  %s25 = sshll.u32 %s1, 4
  %s26 = int_to_ptr.hbm [resolvable:$true] %s25
  %s27 = sshll.u32 %s3, 4
  %s28 = int_to_ptr.hbm [resolvable:$true] %s27
  %31 = dma.general %s26, 256, %s28, %s20, [#allocation5], [#allocation6], 0, 0
  %s32 = smul.u32 2, 4
  %s33 = smul.u32 %s32, 16
  %s34 = smul.u32 %s33, 1
  %s35 = sshll.u32 %s34, 4
  %36 = dma.done [#allocation2], %s35
  %s37 = smul.u32 2, 8
  %s38 = smul.u32 %s37, 1
  %s39 = sshll.u32 %s38, 4
  %40 = dma.done %s20, %s39
  %41 = vsyncmov [#allocation2]
  %s42 = vpop.sfrf %41
  %p43 = scmp.eq.s32.totalorder %s42, 0
  %p44 = pneg %p43
  %46 = shalt.err (%p44)
  %s47 = scalar_lea.sflag [#allocation2], 1
  %48 = vsyncmov %s47
  %s49 = vpop.sfrf %48
  %p50 = scmp.eq.s32.totalorder %s49, 0
  %p51 = pneg %p50
  %53 = shalt.err (%p51)

</llo_original>
